<compile_context>
chip_gen: v7x
topology: tpu7x:2x2x1
jax: 0.10.0
libtpu: 0.0.40
codegen_flags: <defaults>
</compile_context>

<pallas_src>
import functools

import jax
import jax.numpy as jnp
from jax.experimental import pallas as pl
from jax.experimental.pallas import tpu as pltpu


def _round_up(x, m):
    return ((x + m - 1) // m) * m


def _tdnn_kernel(x_ref, halo_ref, w_ref, b_ref, o_ref, win_ref, *,
                 ctx_size, dilation, stride, relu):
    """One grid step = one (batch, output-time-tile) block.

    x_ref:    (1, ts, idim)       main time tile of x (ts = tt*stride rows)
    halo_ref: (1, h_pad, idim)    right-halo rows (second BlockSpec view of x)
    w_ref:    (K, idim, odim)     per-tap matmul weights (resident, 1-buffered)
    b_ref:    (1, odim)           bias (f32, resident, 1-buffered)
    o_ref:    (1, tt, odim)       output tile
    win_ref:  (ts + h_pad, idim)  VMEM scratch: assembled input window
    """
    ts = x_ref.shape[1]
    h_pad = halo_ref.shape[1]
    tt = o_ref.shape[1]
    odim = o_ref.shape[2]

    # Assemble the contiguous input window once; every tap below is a cheap
    # (possibly strided) sublane slice of this VMEM-resident buffer.
    win_ref[0:ts, :] = x_ref[0]
    win_ref[ts:ts + h_pad, :] = halo_ref[0]

    # f32 accumulator, initialized with the bias.  NOTE: acc and each dot
    # result are (tt, odim) f32 VMEM temporaries; the wrapper's VMEM budget
    # for the time-tile size accounts for them.
    acc = jnp.broadcast_to(b_ref[...].astype(jnp.float32), (tt, odim))
    for k in range(ctx_size):               # K is small & static -> unrolled
        start = k * dilation
        if stride == 1:
            xk = win_ref[start:start + tt, :]
        else:
            # TODO(synk): if strided sublane reads show up as K repeated
            # shuffles in the bundle dump, de-interleave the stride phases
            # once during the window assembly instead.
            xk = win_ref[pl.ds(start, tt, stride=stride), :]
        acc = acc + jnp.dot(xk, w_ref[k], preferred_element_type=jnp.float32)

    if relu:
        acc = jnp.maximum(acc, 0.0)
    o_ref[0] = acc.astype(o_ref.dtype)


def tdnn_forward(x_input, masks, weight, bias, *, ctx_size, dilation=1,
                 stride=1, relu=True, batch_norm=False, time_tile=512,
                 compute_dtype=None, vmem_budget_bytes=32 * 1024 * 1024):
    """JAX/Pallas equivalent of TDNN.forward (eval mode: dropout is identity).

    Args:
      x_input: (B, T, idim) array, or tuple ((B, T, idim), (B, T, att_dim)).
      masks:   (B, 1, T) array or None.
      weight:  (odim, idim, ctx_size)  -- same layout as torch Conv1d.weight.
      bias:    (odim,)
      time_tile: requested output rows per grid step (auto-shrunk to fit the
        VMEM budget; sweep 256-1024).
      compute_dtype: e.g. jnp.bfloat16 to halve x / weight HBM traffic
        (f32 accumulation kept).  Default: keep the input dtype.
      vmem_budget_bytes: per-core VMEM budget used to size the time tile
        (32 MiB default fits v5e/v6e/v7x scoped limits with headroom).
    Returns:
      (xs, masks) or ((xs, pos_emb), masks) matching the PyTorch module.
    """
    if batch_norm:
        # TODO(synk): BatchNorm1d (batch_norm=True) not implemented; the
        # module default is batch_norm=False.
        raise NotImplementedError("batch_norm=True is not supported")

    if isinstance(x_input, tuple):
        xs, pos_emb = x_input
    else:
        xs, pos_emb = x_input, None

    B, T, idim = xs.shape
    odim, w_idim, K = weight.shape
    assert w_idim == idim and K == ctx_size
    assert stride >= 1 and dilation >= 1 and ctx_size >= 1
    sub = (K - 1) * dilation
    T_out = (T - sub - 1) // stride + 1
    assert T_out >= 1, "input too short for this context / dilation / stride"

    out_dtype = xs.dtype
    if compute_dtype is None:
        compute_dtype = xs.dtype
    c_isz = jnp.dtype(compute_dtype).itemsize
    o_isz = jnp.dtype(out_dtype).itemsize

    # Dtype-aware sublane multiple: 8 (f32) / 16 (bf16) / 32 (int8/fp8).
    sub_mult = max(8, 32 // c_isz)

    # Right-halo rows needed beyond the main x tile; pad to a sublane-aligned
    # block that divides the time tile (so halo block indices are exact).
    h_needed = max(0, sub - stride + 1)
    h_pad = _round_up(max(h_needed, 1), sub_mult)

    def _vmem_bytes(tt_):
        ts_ = tt_ * stride
        return (2 * ts_ * idim * c_isz            # double-buffered x tile
                + 2 * h_pad * idim * c_isz        # double-buffered halo tile
                + K * idim * odim * c_isz         # single-buffered weights
                + odim * 4                        # bias
                + 2 * tt_ * odim * o_isz          # double-buffered out tile
                + (ts_ + h_pad) * idim * c_isz    # win scratch
                + 3 * tt_ * odim * 4)             # acc/dot/relu f32 temps

    # Output-time tile: multiple of h_pad, capped by T_out, shrunk to budget.
    tt = max(h_pad, min(_round_up(time_tile, h_pad), _round_up(T_out, h_pad)))
    while tt > h_pad and _vmem_bytes(tt) > vmem_budget_bytes:
        tt = max(h_pad, (tt // 2) // h_pad * h_pad)

    n_t = pl.cdiv(T_out, tt)
    ts = tt * stride                       # x rows consumed per tile
    ratio = ts // h_pad                    # halo blocks per x tile (exact)
    last_halo_block = max(0, (T - 1) // h_pad)

    x_c = xs.astype(compute_dtype)
    # torch Conv1d weight (odim, idim, K) -> per-tap weights (K, idim, odim).
    wk = jnp.transpose(weight, (2, 1, 0)).astype(compute_dtype)
    b2 = bias.reshape(1, odim).astype(jnp.float32)

    def x_map(b, i):
        return (b, i, 0)

    def halo_map(b, i):
        # Halo starts at element row (i+1)*ts == block (i+1)*ratio.  Clamp so
        # the DMA never starts past the end of x; when the clamp triggers, no
        # valid output row of this tile reads the halo.
        return (b, jnp.minimum((i + 1) * ratio, last_halo_block), 0)

    kernel = functools.partial(_tdnn_kernel, ctx_size=K, dilation=dilation,
                               stride=stride, relu=relu)

    est_vmem = _vmem_bytes(tt)
    vmem_limit = int(min(64 * 1024 * 1024,
                         max(32 * 1024 * 1024, int(est_vmem * 1.5))))
    cost = pl.CostEstimate(
        flops=2 * B * T_out * K * idim * odim,
        transcendentals=0,
        bytes_accessed=(B * T * idim * c_isz
                        + B * n_t * h_pad * idim * c_isz
                        + K * idim * odim * c_isz + odim * 4
                        + B * T_out * odim * o_isz))

    xs_out = pl.pallas_call(
        kernel,
        out_shape=jax.ShapeDtypeStruct((B, T_out, odim), out_dtype),
        grid_spec=pltpu.PrefetchScalarGridSpec(
            num_scalar_prefetch=0,
            grid=(B, n_t),
            in_specs=[
                pl.BlockSpec((1, ts, idim), x_map),
                pl.BlockSpec((1, h_pad, idim), halo_map),
                # Constant index_map -> single-buffer the resident constants.
                pl.BlockSpec((K, idim, odim), lambda b, i: (0, 0, 0),
                             pipeline_mode=pl.Buffered(1)),
                pl.BlockSpec((1, odim), lambda b, i: (0, 0),
                             pipeline_mode=pl.Buffered(1)),
            ],
            out_specs=pl.BlockSpec((1, tt, odim), lambda b, i: (b, i, 0)),
            scratch_shapes=[pltpu.VMEM((ts + h_pad, idim), compute_dtype)],
        ),
        compiler_params=pltpu.CompilerParams(
            dimension_semantics=("parallel", "parallel"),
            vmem_limit_bytes=vmem_limit,
        ),
        cost_estimate=cost,
    )(x_c, x_c, wk, b2)

    # create_outputs: subsample masks / pos_emb (pure slicing glue; the cost
    # estimate above lets XLA overlap this with the kernel).
    if masks is not None:
        if sub != 0:
            masks = masks[:, :, :-sub]
        masks = masks[:, :, ::stride]
    if pos_emb is not None:
        if sub != 0:
            pos_emb = pos_emb[:, :-sub, :]
        pos_emb = pos_emb[:, ::stride, :]
        return (xs_out, pos_emb), masks
    return xs_out, masks


def _tdnn_reference(xs, weight, bias, *, ctx_size, dilation, stride, relu=True):
    """Pure-JAX reference (Conv1d + bias + ReLU) in float32."""
    B, T, idim = xs.shape
    odim = weight.shape[0]
    sub = (ctx_size - 1) * dilation
    T_out = (T - sub - 1) // stride + 1
    out = jnp.broadcast_to(bias[None, None, :].astype(jnp.float32),
                           (B, T_out, odim))
    for k in range(ctx_size):
        sl = jax.lax.slice_in_dim(
            xs.astype(jnp.float32), k * dilation,
            k * dilation + (T_out - 1) * stride + 1, stride, axis=1)
        out = out + jnp.einsum("btc,co->bto", sl,
                               weight[:, :, k].T.astype(jnp.float32))
    if relu:
        out = jnp.maximum(out, 0.0)
    return out


if __name__ == "__main__":
    base_key = jax.random.PRNGKey(0)

    def make_inputs(case, B, T, idim, odim, K):
        k = jax.random.fold_in(base_key, case)
        kx, kw, kb, kp = jax.random.split(k, 4)
        x = jax.random.normal(kx, (B, T, idim), dtype=jnp.float32)
        w = jax.random.normal(kw, (odim, idim, K), dtype=jnp.float32) * 0.1
        b = jax.random.normal(kb, (odim,), dtype=jnp.float32) * 0.1
        pos = jax.random.normal(kp, (B, T, 16), dtype=jnp.float32)
        m = jnp.ones((B, 1, T), dtype=bool)
        return x, w, b, pos, m

    def check(y, ref, atol, rtol):
        assert y.shape == ref.shape, (y.shape, ref.shape)
        yf = y.astype(jnp.float32)
        err = float(jnp.max(jnp.abs(yf - ref)))
        assert jnp.allclose(yf, ref, atol=atol, rtol=rtol), err

    # Case 1: default-style config (ctx 3, dilation 1, stride 1), tuple input
    # with pos_emb, ragged (partial) output block.
    B, T, idim, odim, K, dil, st = 2, 16, 32, 32, 3, 1, 1
    x, w, b, pos, m = make_inputs(1, B, T, idim, odim, K)
    (y, pos_out), m_out = tdnn_forward((x, pos), m, w, b, ctx_size=K,
                                       dilation=dil, stride=st, relu=True)
    y = jax.block_until_ready(y)
    T_out = (T - (K - 1) * dil - 1) // st + 1
    ref = _tdnn_reference(x, w, b, ctx_size=K, dilation=dil, stride=st)
    assert y.shape == (B, T_out, odim)
    assert m_out.shape == (B, 1, T_out)
    assert pos_out.shape == (B, T_out, 16)
    check(y, ref, 5e-3, 5e-3)

    # Case 2: wider dilated context (ctx 5, dilation 2), masks only.
    B, T, idim, odim, K, dil, st = 2, 24, 32, 64, 5, 2, 1
    x, w, b, _, m = make_inputs(2, B, T, idim, odim, K)
    y, m_out = tdnn_forward(x, m, w, b, ctx_size=K, dilation=dil, stride=st)
    y = jax.block_until_ready(y)
    T_out = (T - (K - 1) * dil - 1) // st + 1
    ref = _tdnn_reference(x, w, b, ctx_size=K, dilation=dil, stride=st)
    assert y.shape == (B, T_out, odim) and m_out.shape == (B, 1, T_out)
    check(y, ref, 5e-3, 5e-3)

    # Case 3: strided subsampling (stride 2) -- covers the strided tap path.
    B, T, idim, odim, K, dil, st = 2, 17, 32, 32, 3, 1, 2
    x, w, b, _, m = make_inputs(3, B, T, idim, odim, K)
    y, m_out = tdnn_forward(x, m, w, b, ctx_size=K, dilation=dil, stride=st)
    y = jax.block_until_ready(y)
    T_out = (T - (K - 1) * dil - 1) // st + 1
    ref = _tdnn_reference(x, w, b, ctx_size=K, dilation=dil, stride=st)
    assert y.shape == (B, T_out, odim) and m_out.shape == (B, 1, T_out)
    check(y, ref, 5e-3, 5e-3)

    # Case 4: multiple time tiles with a ragged last tile (small time_tile)
    # -- exercises the halo BlockSpec view, its end-of-array clamp and the
    # partial final output block (garbage never leaks into valid rows).
    B, T, idim, odim, K, dil, st = 2, 40, 32, 32, 3, 1, 1
    x, w, b, _, m = make_inputs(4, B, T, idim, odim, K)
    y, m_out = tdnn_forward(x, m, w, b, ctx_size=K, dilation=dil, stride=st,
                            time_tile=8)
    y = jax.block_until_ready(y)
    T_out = (T - (K - 1) * dil - 1) // st + 1
    ref = _tdnn_reference(x, w, b, ctx_size=K, dilation=dil, stride=st)
    assert y.shape == (B, T_out, odim) and m_out.shape == (B, 1, T_out)
    check(y, ref, 5e-3, 5e-3)

    # Case 5: bfloat16 compute dtype (f32 accumulation), looser tolerance.
    B, T, idim, odim, K, dil, st = 2, 16, 32, 32, 3, 1, 1
    x, w, b, _, m = make_inputs(5, B, T, idim, odim, K)
    y, m_out = tdnn_forward(x, m, w, b, ctx_size=K, dilation=dil, stride=st,
                            compute_dtype=jnp.bfloat16)
    y = jax.block_until_ready(y)
    ref = _tdnn_reference(x, w, b, ctx_size=K, dilation=dil, stride=st)
    check(y, ref, 1e-1, 1e-1)

    print("KERNEL_OK")
</pallas_src>

<mosaic_0001>
module attributes {stable_mosaic.version = 11 : i64} {
  func.func @_tdnn_kernel(%arg0: i32, %arg1: i32, %arg2: memref<1x16x32xf32, #tpu.memory_space<vmem>>, %arg3: memref<1x8x32xf32, #tpu.memory_space<vmem>>, %arg4: memref<3x32x32xf32, #tpu.memory_space<vmem>>, %arg5: memref<1x32xf32, #tpu.memory_space<vmem>>, %arg6: memref<1x16x32xf32, #tpu.memory_space<vmem>>, %arg7: memref<24x32xf32, #tpu.memory_space<vmem>>) attributes {dimension_semantics = [#tpu.dimension_semantics<parallel>, #tpu.dimension_semantics<parallel>], iteration_bounds = array<i64: 2, 1>, scalar_prefetch = 0 : i64, scratch_operands = 1 : i64, tpu.core_type = #tpu.core_type<tc>, window_params = [{transform_indices = @transform_0, window_bounds = array<i64: 1, 16, 32>}, {transform_indices = @transform_1, window_bounds = array<i64: 1, 8, 32>}, {pipeline_mode = #tpu.pipeline_mode<synchronous>, transform_indices = @transform_2, window_bounds = array<i64: 3, 32, 32>}, {pipeline_mode = #tpu.pipeline_mode<synchronous>, transform_indices = @transform_3, window_bounds = array<i64: 1, 32>}, {transform_indices = @transform_4, window_bounds = array<i64: 1, 16, 32>}]} {
    %c0 = arith.constant 0 : index
    %c0_0 = arith.constant 0 : index
    %c0_1 = arith.constant 0 : index
    %0 = vector.load %arg2[%c0, %c0_0, %c0_1] : memref<1x16x32xf32, #tpu.memory_space<vmem>>, vector<1x16x32xf32>
    %1 = vector.shape_cast %0 : vector<1x16x32xf32> to vector<16x32xf32>
    %c0_2 = arith.constant 0 : index
    %c0_3 = arith.constant 0 : index
    %2 = vector.load %arg7[%c0_2, %c0_3] : memref<24x32xf32, #tpu.memory_space<vmem>>, vector<16x32xf32>
    tpu.vector_store %arg7[%c0_2, %c0_3], %1 {strides = array<i32>} : memref<24x32xf32, #tpu.memory_space<vmem>>, vector<16x32xf32>,
    %c0_4 = arith.constant 0 : index
    %c0_5 = arith.constant 0 : index
    %c0_6 = arith.constant 0 : index
    %3 = vector.load %arg3[%c0_4, %c0_5, %c0_6] : memref<1x8x32xf32, #tpu.memory_space<vmem>>, vector<1x8x32xf32>
    %4 = vector.shape_cast %3 : vector<1x8x32xf32> to vector<8x32xf32>
    %c16 = arith.constant 16 : index
    %c0_7 = arith.constant 0 : index
    %5 = vector.load %arg7[%c16, %c0_7] : memref<24x32xf32, #tpu.memory_space<vmem>>, vector<8x32xf32>
    tpu.vector_store %arg7[%c16, %c0_7], %4 {strides = array<i32>} : memref<24x32xf32, #tpu.memory_space<vmem>>, vector<8x32xf32>,
    %c0_8 = arith.constant 0 : index
    %c0_9 = arith.constant 0 : index
    %6 = vector.load %arg5[%c0_8, %c0_9] : memref<1x32xf32, #tpu.memory_space<vmem>>, vector<1x32xf32>
    %7 = vector.shape_cast %6 : vector<1x32xf32> to vector<1x32xf32>
    %8 = vector.broadcast %7 : vector<1x32xf32> to vector<16x32xf32>
    %c0_10 = arith.constant 0 : index
    %c0_11 = arith.constant 0 : index
    %9 = vector.load %arg7[%c0_10, %c0_11] : memref<24x32xf32, #tpu.memory_space<vmem>>, vector<16x32xf32>
    %c0_12 = arith.constant 0 : index
    %c0_13 = arith.constant 0 : index
    %c0_14 = arith.constant 0 : index
    %10 = vector.load %arg4[%c0_12, %c0_13, %c0_14] : memref<3x32x32xf32, #tpu.memory_space<vmem>>, vector<1x32x32xf32>
    %11 = vector.shape_cast %10 : vector<1x32x32xf32> to vector<32x32xf32>
    %cst = arith.constant dense<0.000000e+00> : vector<16x32xf32>
    %12 = tpu.matmul %9, %11, %cst {dimension_numbers = #tpu.dot_dimension_numbers<[1], [0], [0], [1], [0, 0, 1, 1], [], []>} : vector<16x32xf32>, vector<32x32xf32>, vector<16x32xf32> -> vector<16x32xf32>
    %13 = arith.addf %8, %12 : vector<16x32xf32>
    %c1 = arith.constant 1 : index
    %c0_15 = arith.constant 0 : index
    %14 = vector.load %arg7[%c1, %c0_15] : memref<24x32xf32, #tpu.memory_space<vmem>>, vector<16x32xf32>
    %c1_16 = arith.constant 1 : index
    %c0_17 = arith.constant 0 : index
    %c0_18 = arith.constant 0 : index
    %15 = vector.load %arg4[%c1_16, %c0_17, %c0_18] : memref<3x32x32xf32, #tpu.memory_space<vmem>>, vector<1x32x32xf32>
    %16 = vector.shape_cast %15 : vector<1x32x32xf32> to vector<32x32xf32>
    %cst_19 = arith.constant dense<0.000000e+00> : vector<16x32xf32>
    %17 = tpu.matmul %14, %16, %cst_19 {dimension_numbers = #tpu.dot_dimension_numbers<[1], [0], [0], [1], [0, 0, 1, 1], [], []>} : vector<16x32xf32>, vector<32x32xf32>, vector<16x32xf32> -> vector<16x32xf32>
    %18 = arith.addf %13, %17 : vector<16x32xf32>
    %c2 = arith.constant 2 : index
    %c0_20 = arith.constant 0 : index
    %19 = vector.load %arg7[%c2, %c0_20] : memref<24x32xf32, #tpu.memory_space<vmem>>, vector<16x32xf32>
    %c2_21 = arith.constant 2 : index
    %c0_22 = arith.constant 0 : index
    %c0_23 = arith.constant 0 : index
    %20 = vector.load %arg4[%c2_21, %c0_22, %c0_23] : memref<3x32x32xf32, #tpu.memory_space<vmem>>, vector<1x32x32xf32>
    %21 = vector.shape_cast %20 : vector<1x32x32xf32> to vector<32x32xf32>
    %cst_24 = arith.constant dense<0.000000e+00> : vector<16x32xf32>
    %22 = tpu.matmul %19, %21, %cst_24 {dimension_numbers = #tpu.dot_dimension_numbers<[1], [0], [0], [1], [0, 0, 1, 1], [], []>} : vector<16x32xf32>, vector<32x32xf32>, vector<16x32xf32> -> vector<16x32xf32>
    %23 = arith.addf %18, %22 : vector<16x32xf32>
    %cst_25 = arith.constant 0.000000e+00 : f32
    %24 = vector.broadcast %cst_25 : f32 to vector<16x32xf32>
    %25 = arith.maximumf %23, %24 : vector<16x32xf32>
    %c0_26 = arith.constant 0 : index
    %c0_27 = arith.constant 0 : index
    %c0_28 = arith.constant 0 : index
    %26 = vector.load %arg6[%c0_26, %c0_27, %c0_28] : memref<1x16x32xf32, #tpu.memory_space<vmem>>, vector<1x16x32xf32>
    %27 = vector.shape_cast %26 : vector<1x16x32xf32> to vector<16x32xf32>
    %28 = vector.shape_cast %25 : vector<16x32xf32> to vector<1x16x32xf32>
    tpu.vector_store %arg6[%c0_26, %c0_27, %c0_28], %28 {strides = array<i32>} : memref<1x16x32xf32, #tpu.memory_space<vmem>>, vector<1x16x32xf32>,
    return
  }
  func.func @transform_0(%arg0: i32, %arg1: i32) -> (i32, i32, i32) {
    %c0_i32 = arith.constant 0 : i32
    %c0_i32_0 = arith.constant 0 : i32
    return %arg0, %arg1, %c0_i32 : i32, i32, i32
  }
  func.func @transform_1(%arg0: i32, %arg1: i32) -> (i32, i32, i32) {
    %c1_i32 = arith.constant 1 : i32
    %0 = arith.addi %arg1, %c1_i32 : i32
    %c2_i32 = arith.constant 2 : i32
    %1 = arith.muli %0, %c2_i32 : i32
    %c1_i32_0 = arith.constant 1 : i32
    %2 = arith.minsi %1, %c1_i32_0 : i32
    %c0_i32 = arith.constant 0 : i32
    %c0_i32_1 = arith.constant 0 : i32
    return %arg0, %2, %c0_i32 : i32, i32, i32
  }
  func.func @transform_2(%arg0: i32, %arg1: i32) -> (i32, i32, i32) {
    %c0_i32 = arith.constant 0 : i32
    %c0_i32_0 = arith.constant 0 : i32
    %c0_i32_1 = arith.constant 0 : i32
    %c0_i32_2 = arith.constant 0 : i32
    return %c0_i32, %c0_i32_0, %c0_i32_1 : i32, i32, i32
  }
  func.func @transform_3(%arg0: i32, %arg1: i32) -> (i32, i32) {
    %c0_i32 = arith.constant 0 : i32
    %c0_i32_0 = arith.constant 0 : i32
    %c0_i32_1 = arith.constant 0 : i32
    return %c0_i32, %c0_i32_0 : i32, i32
  }
  func.func @transform_4(%arg0: i32, %arg1: i32) -> (i32, i32, i32) {
    %c0_i32 = arith.constant 0 : i32
    %c0_i32_0 = arith.constant 0 : i32
    return %arg0, %arg1, %c0_i32 : i32, i32, i32
  }
}

</mosaic_0001>

<llo_original>
// kernel: tpu_custom_call.1
$region0: #{tpu_custom_call.1}
  #allocation0 [shape = 'u32[]', space=smem, size = 0x4, offset = 0x4, fixed_abs, tag = 'smem constant byte address 0x4 - core index']
  #allocation1 [shape = 'u32[144,128]{1,0:T(1,128)}', space=vmem, size = 0x12000, scoped, tag = 'internal scratch']
  #allocation2 [shape = 'f32[24,32]{1,0:T(8,128)}', space=vmem, size = 0x3000, scoped, tag = 'scratch operand']
  %s0 = inlined_call_operand.hbm [shape: f32[2,16,32], index: 0, kind: input, shape index: {}]
  %s1 = inlined_call_operand.hbm [shape: f32[2,16,32], index: 1, kind: input, shape index: {}]
  %s2 = inlined_call_operand.hbm [shape: f32[3,32,32], index: 2, kind: input, shape index: {}]
  %s3 = inlined_call_operand.vmem [shape: f32[1,32], index: 3, kind: input, shape index: {}]
  %s4 = inlined_call_operand.vmem [shape: f32[2,14,32], index: 4, kind: output, shape index: {}]
  %s5 = sld [smem:[#allocation0]]
  $region61: #{tpu_custom_call.1} parent=0
    _
  %s7 = ssub.s32 1, %s5
  %s8 = scalar_select 0, %s7, %s5
  $region1: #{tpu_custom_call.1} parent=0
    #allocation3 [shape = 'u8[16384]{0}', space=vmem, size = 0x4000, scoped, tag = 'input window, operand 0']
    #allocation4 [shape = 's32[2]{0}', space=sflag, size = 0x8, scoped, tag = 'scoped memory for tpu_custom_call.1']
    #allocation5 [shape = 'u8[8192]{0}', space=vmem, size = 0x2000, scoped, tag = 'input window, operand 1']
    #allocation6 [shape = 's32[2]{0}', space=sflag, size = 0x8, scoped, tag = 'scoped memory for tpu_custom_call.1']
    #allocation7 [shape = 'u8[49152]{0}', space=vmem, size = 0xc000, scoped, tag = 'input window, operand 2, single buffered']
    %9 = vsyncpa [#allocation4], 0
    %s10 = scalar_lea.sflag [#allocation4], 1
    %11 = vsyncpa %s10, 0
    %12 = vsyncpa [#allocation6], 0
    %s13 = scalar_lea.sflag [#allocation6], 1
    %14 = vsyncpa %s13, 0
    loop: start=0, step=1, limit=4
    $region2: #{tpu_custom_call.1} parent=1 // loop_pre_header
      _
    $region3: #{tpu_custom_call.1} parent=1 // loop_header
      %s16 = sphi 0, %s20
      %p17 = scmp.ge.s32.totalorder %s16, 4
      %s23 = sphi 0, %s35
      %s24 = sphi 0, %s31
      %s25 = sphi 0, %s23
      %s26 = sphi 0, %s24
      %s27 = sphi 0, %s25
      %s28 = sphi 0, %s26
      %s40 = sphi 0, %s42
      %s43 = sphi 0, %s40
      %s44 = sphi 0, %s43
      %s60 = sphi 0, %s44
      %s76 = sphi 0, %s78
      %s79 = sphi 0, %s76
      %s80 = sphi 0, %s79
      %s96 = sphi 0, %s80
      %s100 = sphi 0, %s100
      %s102 = sphi 0, %s100
      %s103 = sphi 0, %s102
      %s117 = sphi 0, %s103
      %s121 = sphi 0, %s121
      %s123 = sphi 0, %s121
      %s124 = sphi 0, %s123
      %s138 = sphi 0, %s124
      %s146 = sphi 0, %s148
      %s149 = sphi 0, %s146
      %s150 = sphi 0, %s149
      %s166 = sphi 0, %s150
    $region4: #{tpu_custom_call.1} parent=1 // loop_header_branch
      %19 = sbr.rel (%p17) target = $region8
    $region5: #{tpu_custom_call.1} parent=1 // loop_body
      %s21 = ssub.s32 %s16, 1
      %s22 = ssub.s32 %s16, 2
      %s29 = sadd.s32 1, %s24
      %p30 = scmp.ge.s32.totalorder %s29, 1
      %s31 = scalar_select %p30, 0, %s29
      %s32 = sadd.s32 1, %s23
      %s33 = scalar_select %p30, %s32, %s23
      %p34 = scmp.ge.s32.totalorder %s33, 2
      %s35 = scalar_select %p34, 0, %s33
      %s36 = ssub.s32 %s23, %s35
      %s37 = ssub.s32 %s24, %s31
      %s38 = sor.u32 %s36, %s37
      %p39 = scmp.eq.s32.totalorder %s38, 0
      %s41 = sadd.s32 %s40, 1
      %s42 = scalar_select %p39, %s40, %s41
      %p45 = pneg %p39
      %p46 = scmp.eq.s32.totalorder %s16, 1
      %p47 = por %p45, %p46
      %p48 = scmp.ne.s32.totalorder %s40, %s43
      %p49 = scmp.eq.s32.totalorder %s16, 0
      %p50 = por %p48, %p49
      %p51 = scmp.ne.s32.totalorder %s40, %s43
      %p52 = scmp.eq.s32.totalorder %s21, 1
      %p53 = por %p51, %p52
      %p54 = scmp.ne.s32.totalorder %s43, %s44
      %p55 = scmp.eq.s32.totalorder %s21, 0
      %p56 = por %p54, %p55
      %p57 = scmp.ne.s32.totalorder %s43, %s44
      %p58 = scmp.eq.s32.totalorder %s22, 1
      %p59 = por %p57, %p58
      %p61 = scmp.ne.s32.totalorder %s44, %s60
      %p62 = scmp.eq.s32.totalorder %s22, 0
      %p63 = por %p61, %p62
      %s64 = sadd.s32 %s24, 1
      %s65 = smul.u32 %s64, 2
      %p66 = scmp.lt.s32.totalorder %s65, 1
      %s67 = scalar_select %p66, %s65, 1
      %s68 = sadd.s32 %s31, 1
      %s69 = smul.u32 %s68, 2
      %p70 = scmp.lt.s32.totalorder %s69, 1
      %s71 = scalar_select %p70, %s69, 1
      %s72 = ssub.s32 %s23, %s35
      %s73 = ssub.s32 %s67, %s71
      %s74 = sor.u32 %s72, %s73
      %p75 = scmp.eq.s32.totalorder %s74, 0
      %s77 = sadd.s32 %s76, 1
      %s78 = scalar_select %p75, %s76, %s77
      %p81 = pneg %p75
      %p82 = scmp.eq.s32.totalorder %s16, 1
      %p83 = por %p81, %p82
      %p84 = scmp.ne.s32.totalorder %s76, %s79
      %p85 = scmp.eq.s32.totalorder %s16, 0
      %p86 = por %p84, %p85
      %p87 = scmp.ne.s32.totalorder %s76, %s79
      %p88 = scmp.eq.s32.totalorder %s21, 1
      %p89 = por %p87, %p88
      %p90 = scmp.ne.s32.totalorder %s79, %s80
      %p91 = scmp.eq.s32.totalorder %s21, 0
      %p92 = por %p90, %p91
      %p93 = scmp.ne.s32.totalorder %s79, %s80
      %p94 = scmp.eq.s32.totalorder %s22, 1
      %p95 = por %p93, %p94
      %p97 = scmp.ne.s32.totalorder %s80, %s96
      %p98 = scmp.eq.s32.totalorder %s22, 0
      %p99 = por %p97, %p98
      %s101 = sadd.s32 %s100, 1
      %p104 = scmp.eq.s32.totalorder %s16, 1
      %p105 = scmp.ne.s32.totalorder %s100, %s102
      %p106 = scmp.eq.s32.totalorder %s16, 0
      %p107 = por %p105, %p106
      %p108 = scmp.ne.s32.totalorder %s100, %s102
      %p109 = scmp.eq.s32.totalorder %s21, 1
      %p110 = por %p108, %p109
      %p111 = scmp.ne.s32.totalorder %s102, %s103
      %p112 = scmp.eq.s32.totalorder %s21, 0
      %p113 = por %p111, %p112
      %p114 = scmp.ne.s32.totalorder %s102, %s103
      %p115 = scmp.eq.s32.totalorder %s22, 1
      %p116 = por %p114, %p115
      %p118 = scmp.ne.s32.totalorder %s103, %s117
      %p119 = scmp.eq.s32.totalorder %s22, 0
      %p120 = por %p118, %p119
      %s122 = sadd.s32 %s121, 1
      %p125 = scmp.eq.s32.totalorder %s16, 1
      %p126 = scmp.ne.s32.totalorder %s121, %s123
      %p127 = scmp.eq.s32.totalorder %s16, 0
      %p128 = por %p126, %p127
      %p129 = scmp.ne.s32.totalorder %s121, %s123
      %p130 = scmp.eq.s32.totalorder %s21, 1
      %p131 = por %p129, %p130
      %p132 = scmp.ne.s32.totalorder %s123, %s124
      %p133 = scmp.eq.s32.totalorder %s21, 0
      %p134 = por %p132, %p133
      %p135 = scmp.ne.s32.totalorder %s123, %s124
      %p136 = scmp.eq.s32.totalorder %s22, 1
      %p137 = por %p135, %p136
      %p139 = scmp.ne.s32.totalorder %s124, %s138
      %p140 = scmp.eq.s32.totalorder %s22, 0
      %p141 = por %p139, %p140
      %s142 = ssub.s32 %s23, %s35
      %s143 = ssub.s32 %s24, %s31
      %s144 = sor.u32 %s142, %s143
      %p145 = scmp.eq.s32.totalorder %s144, 0
      %s147 = sadd.s32 %s146, 1
      %s148 = scalar_select %p145, %s146, %s147
      %p151 = pneg %p145
      %p152 = scmp.eq.s32.totalorder %s16, 1
      %p153 = por %p151, %p152
      %p154 = scmp.ne.s32.totalorder %s146, %s149
      %p155 = scmp.eq.s32.totalorder %s16, 0
      %p156 = por %p154, %p155
      %p157 = scmp.ne.s32.totalorder %s146, %s149
      %p158 = scmp.eq.s32.totalorder %s21, 1
      %p159 = por %p157, %p158
      %p160 = scmp.ne.s32.totalorder %s149, %s150
      %p161 = scmp.eq.s32.totalorder %s21, 0
      %p162 = por %p160, %p161
      %p163 = scmp.ne.s32.totalorder %s149, %s150
      %p164 = scmp.eq.s32.totalorder %s22, 1
      %p165 = por %p163, %p164
      %p167 = scmp.ne.s32.totalorder %s150, %s166
      %p168 = scmp.eq.s32.totalorder %s22, 0
      %p169 = por %p167, %p168
      %p170 = scmp.le.s32.totalorder 1, %s16
      %p171 = scmp.lt.s32.totalorder %s16, 3
      %p172 = pnand %p170, %p171
      %p173 = pneg %p172
      // Predicated region
      $region9: #{tpu_custom_call.1} parent=5 // pred_check
        _
      $region10: #{tpu_custom_call.1} parent=5 // pred_check_branch
        %175 = sbr.rel (%p172) target = $region12
      $region11: #{tpu_custom_call.1} parent=5 // pred_region
        %s176 = ssub.s32 %s16, 1
        // Predicated region
        $region13: #{tpu_custom_call.1} parent=11 // pred_check
          %p177 = pneg %p113
        $region14: #{tpu_custom_call.1} parent=11 // pred_check_branch
          %179 = sbr.rel (%p177) target = $region16
        $region15: #{tpu_custom_call.1} parent=11 // pred_region
          %s181 = ssub.s32 1536, 1536
          %182 = vsyncadd [#allocation6], %s181
          %s183 = sshll.u32 [#allocation7], 4
          %s184 = int_to_ptr.vmem [resolvable:$true] %s183
          %189 = dma.hbm_to_vmem [thread:$0]  %s2, 1536, %s184, [#allocation6], 128, 128, 8
        $region16: #{tpu_custom_call.1} parent=11 // pred_fallthru
          _
        // Predicated region
        $region17: #{tpu_custom_call.1} parent=11 // pred_check
          %p190 = pneg %p134
        $region18: #{tpu_custom_call.1} parent=11 // pred_check_branch
          %192 = sbr.rel (%p190) target = $region20
        $region19: #{tpu_custom_call.1} parent=11 // pred_region
          _
        $region20: #{tpu_custom_call.1} parent=11 // pred_fallthru
          _
      $region12: #{tpu_custom_call.1} parent=5 // pred_fallthru
        _
      %p193 = scmp.lt.s32.totalorder %s16, 2
      // Predicated region
      $region21: #{tpu_custom_call.1} parent=5 // pred_check
        %p194 = pneg %p193
      $region22: #{tpu_custom_call.1} parent=5 // pred_check_branch
        %196 = sbr.rel (%p194) target = $region24
      $region23: #{tpu_custom_call.1} parent=5 // pred_region
        // Predicated region
        $region25: #{tpu_custom_call.1} parent=23 // pred_check
          %p197 = pneg %p50
        $region26: #{tpu_custom_call.1} parent=23 // pred_check_branch
          %199 = sbr.rel (%p197) target = $region28
        $region27: #{tpu_custom_call.1} parent=23 // pred_region
          %s200 = sand.u32 %s40, 1
          %s201 = scalar_lea.sflag [#allocation4], %s200
          %s202 = sand.u32 %s40, 1
          %s203 = smul.addr %s202, 16
          %s204 = scalar_lea.vmem [#allocation3], %s203
          %s205 = smul.u32 2, %s24
          %s207 = ssub.s32 256, 256
          %208 = vsyncadd %s201, %s207
          %s209 = smul.addr %s23, 2
          %s210 = sadd.s32 %s205, %s209
          %s211 = smul.addr %s210, 128
          %s212 = scalar_lea.hbm %s0, %s211
          %s213 = sshll.u32 %s204, 4
          %s214 = int_to_ptr.vmem [resolvable:$true] %s213
          %219 = dma.hbm_to_vmem [thread:$0]  %s212, 256, %s214, %s201, 128, 128, 8
        $region28: #{tpu_custom_call.1} parent=23 // pred_fallthru
          _
        // Predicated region
        $region29: #{tpu_custom_call.1} parent=23 // pred_check
          %p220 = pneg %p86
        $region30: #{tpu_custom_call.1} parent=23 // pred_check_branch
          %222 = sbr.rel (%p220) target = $region32
        $region31: #{tpu_custom_call.1} parent=23 // pred_region
          %s223 = sand.u32 %s16, 1
          %s224 = scalar_lea.sflag [#allocation6], %s223
          %s225 = sand.u32 %s76, 1
          %s226 = smul.addr %s225, 8
          %s227 = scalar_lea.vmem [#allocation5], %s226
          %s228 = sadd.s32 %s24, 1
          %s229 = smul.u32 %s228, 2
          %p230 = scmp.lt.s32.totalorder %s229, 1
          %s231 = scalar_select %p230, %s229, 1
          %s233 = ssub.s32 128, 128
          %234 = vsyncadd %s224, %s233
          %s235 = smul.addr %s23, 2
          %s236 = sadd.s32 %s231, %s235
          %s237 = smul.addr %s236, 128
          %s238 = scalar_lea.hbm %s1, %s237
          %s240 = sshll.u32 %s227, 4
          %s241 = int_to_ptr.vmem [resolvable:$true] %s240
          %243 = dma.hbm_to_vmem [thread:$0]  %s238, 128, %s241, %s224
        $region32: #{tpu_custom_call.1} parent=23 // pred_fallthru
          _
      $region24: #{tpu_custom_call.1} parent=5 // pred_fallthru
        _
      %p244 = scmp.le.s32.totalorder 1, %s16
      %p245 = scmp.lt.s32.totalorder %s16, 3
      %p246 = pnand %p244, %p245
      %p247 = pneg %p246
      // Predicated region
      $region33: #{tpu_custom_call.1} parent=5 // pred_check
        _
      $region34: #{tpu_custom_call.1} parent=5 // pred_check_branch
        %249 = sbr.rel (%p246) target = $region36
      $region35: #{tpu_custom_call.1} parent=5 // pred_region
        %s250 = ssub.s32 %s16, 1
        %s251 = sand.u32 %s43, 1
        %s252 = scalar_lea.sflag [#allocation4], %s251
        %s253 = sand.u32 %s43, 1
        %s254 = smul.addr %s253, 16
        %s255 = scalar_lea.vmem [#allocation3], %s254
        // Predicated region
        $region37: #{tpu_custom_call.1} parent=35 // pred_check
          %p256 = pneg %p56
        $region38: #{tpu_custom_call.1} parent=35 // pred_check_branch
          %258 = sbr.rel (%p256) target = $region40
        $region39: #{tpu_custom_call.1} parent=35 // pred_region
          %259 = dma.done %s252, 256
        $region40: #{tpu_custom_call.1} parent=35 // pred_fallthru
          _
        %s260 = sand.u32 %s21, 1
        %s261 = scalar_lea.sflag [#allocation6], %s260
        %s262 = sand.u32 %s79, 1
        %s263 = smul.addr %s262, 8
        %s264 = scalar_lea.vmem [#allocation5], %s263
        // Predicated region
        $region41: #{tpu_custom_call.1} parent=35 // pred_check
          %p265 = pneg %p92
        $region42: #{tpu_custom_call.1} parent=35 // pred_check_branch
          %267 = sbr.rel (%p265) target = $region44
        $region43: #{tpu_custom_call.1} parent=35 // pred_region
          %268 = dma.done %s261, 128
        $region44: #{tpu_custom_call.1} parent=35 // pred_fallthru
          _
        // Predicated region
        $region45: #{tpu_custom_call.1} parent=35 // pred_check
          %p269 = pneg %p113
        $region46: #{tpu_custom_call.1} parent=35 // pred_check_branch
          %271 = sbr.rel (%p269) target = $region48
        $region47: #{tpu_custom_call.1} parent=35 // pred_region
          %272 = dma.done [#allocation6], 1536
        $region48: #{tpu_custom_call.1} parent=35 // pred_fallthru
          _
        %s273 = sand.u32 %s43, 1
        %s274 = scalar_lea.sflag [#allocation4], %s273
        %s275 = sand.u32 %s43, 1
        %s276 = smul.addr %s275, 16
        %s277 = scalar_lea.vmem [#allocation3], %s276
        %p278 = pneg %p56
        %p279 = pneg %p53
        %s280 = sand.u32 %s21, 1
        %s281 = scalar_lea.sflag [#allocation6], %s280
        %s282 = sand.u32 %s79, 1
        %s283 = smul.addr %s282, 8
        %s284 = scalar_lea.vmem [#allocation5], %s283
        %p285 = pneg %p92
        %p286 = pneg %p89
        %p287 = pneg %p113
        %p288 = pneg %p110
        %p289 = pneg %p134
        %p290 = pneg %p131
        %p291 = pneg %p162
        %p292 = pneg %p159
        %s293 = smul.u32 2, %s26
        %p294 = scmp.lt.s32.totalorder %s25, 1
        %s295 = scalar_select %p294, %s25, 1
        %p296 = scmp.lt.s32.totalorder %s293, 1
        %s297 = scalar_select %p296, %s293, 1
        %s298 = smul.addr %s295, 2
        %s299 = sadd.s32 %s297, %s298
        %s300 = smul.addr %s299, 8
        %s301 = scalar_lea.vmem %s4, %s300
        %s302 = smul.u32 2, %s26
        %s303 = sadd.s32 %s26, 1
        %s304 = smul.u32 %s303, 2
        %p305 = scmp.lt.s32.totalorder %s304, 1
        %s306 = scalar_select %p305, %s304, 1
        %s307 = smul.u32 2, %s26
        %p308 = scmp.lt.s32.totalorder %s25, 1
        %s309 = scalar_select %p308, %s25, 1
        %p310 = scmp.lt.s32.totalorder %s307, 1
        %s311 = scalar_select %p310, %s307, 1
        %s312 = smul.addr %s309, 2
        %s313 = sadd.s32 %s311, %s312
        %s314 = smul.addr %s313, 8
        %s315 = scalar_lea.vmem %s4, %s314
        %s316 = smul.u32 2, %s26
        %v317 = vld [vmem:[%s255] sm:$0xff]
        %v318 = vld [vmem:[%s255 + $0x8] sm:$0xff]
        %vm319 = vcmask 261120
        %320 = vst.msk [vmem:[#allocation2] sm:$0xff] %vm319, %v317
        %321 = vst.msk [vmem:[#allocation2 + $0x8] sm:$0xff] %vm319, %v318
        %v322 = vld [vmem:[%s264] sm:$0xff]
        %323 = vst.msk [vmem:[#allocation2 + $0x10] sm:$0xff] %vm319, %v322
        %v324 = vld [vmem:[%s3] sm:$0x1]
        %v326 = vlaneseq
        %v327 = vshrl.u32 %v326, 7
        %v328 = vsub.s32 0, %v327
        %v329 = vrot.slane %v324, %v328
        %v331 = vld [vmem:[#allocation2] sm:$0xff]
        %v332 = vld [vmem:[#allocation2 + $0x8] sm:$0xff]
        %v333 = vld [vmem:[#allocation7] sm:$0xff]
        %v334 = vld [vmem:[#allocation7 + $0x8] sm:$0xff]
        %v335 = vld [vmem:[#allocation7 + $0x10] sm:$0xff]
        %v336 = vld [vmem:[#allocation7 + $0x18] sm:$0xff]
        %v338 = vsel %vm319, %v331, 0
        %v341 = vsel %vm319, %v332, 0
        %343 = vmatprep.subr.mxu0 0.0
        %344 = vmatpush1.msra.mxu0 %v333
        %345 = vmatprep.subr.mxu0 0.0
        %346 = vmatpush1.msra.mxu0 %v334
        %347 = vmatprep.subr.mxu0 0.0
        %348 = vmatpush1.msra.mxu0 %v335
        %349 = vmatprep.subr.mxu0 0.0
        %350 = vmatpush1.msra.mxu0 %v336
        %351 = vmatprep.subr.mxu0 0.0
        %352 = vmatpush1.msra.mxu0 0.0
        %353 = vmatprep.subr.mxu0 0.0
        %354 = vmatpush1.msra.mxu0 0.0
        %355 = vmatprep.subr.mxu0 0.0
        %356 = vmatpush1.msra.mxu0 0.0
        %357 = vmatprep.subr.mxu0 0.0
        %358 = vmatpush1.msra.mxu0 0.0
        %359 = vmatprep.subr.mxu0 0.0
        %360 = vmatpush1.msra.mxu0 0.0
        %361 = vmatprep.subr.mxu0 0.0
        %362 = vmatpush1.msra.mxu0 0.0
        %363 = vmatprep.subr.mxu0 0.0
        %364 = vmatpush1.msra.mxu0 0.0
        %365 = vmatprep.subr.mxu0 0.0
        %366 = vmatpush1.msra.mxu0 0.0
        %367 = vmatprep.subr.mxu0 0.0
        %368 = vmatpush1.msra.mxu0 0.0
        %369 = vmatprep.subr.mxu0 0.0
        %370 = vmatpush1.msra.mxu0 0.0
        %371 = vmatprep.subr.mxu0 0.0
        %372 = vmatpush1.msra.mxu0 0.0
        %373 = vmatprep.subr.mxu0 0.0
        %374 = vmatpush1.msra.mxu0 0.0
        %375 = vmatprep.subr.mxu0 0.0
        %376 = vmatpush1.msra.mxu0 0.0
        %377 = vmatprep.subr.mxu0 0.0
        %378 = vmatpush1.msra.mxu0 0.0
        %379 = vmatprep.subr.mxu0 0.0
        %380 = vmatpush1.msra.mxu0 0.0
        %381 = vmatprep.subr.mxu0 0.0
        %382 = vmatpush1.msra.mxu0 0.0
        %383 = vmatprep.subr.mxu0 0.0
        %384 = vmatpush1.msra.mxu0 0.0
        %385 = vmatprep.subr.mxu0 0.0
        %386 = vmatpush1.msra.mxu0 0.0
        %387 = vmatprep.subr.mxu0 0.0
        %388 = vmatpush1.msra.mxu0 0.0
        %389 = vmatprep.subr.mxu0 0.0
        %390 = vmatpush1.msra.mxu0 0.0
        %391 = vmatprep.subr.mxu0 0.0
        %392 = vmatpush1.msra.mxu0 0.0
        %393 = vmatprep.subr.mxu0 0.0
        %394 = vmatpush1.msra.mxu0 0.0
        %395 = vmatprep.subr.mxu0 0.0
        %396 = vmatpush1.msra.mxu0 0.0
        %397 = vmatprep.subr.mxu0 0.0
        %398 = vmatpush1.msra.mxu0 0.0
        %399 = vmatprep.subr.mxu0 0.0
        %400 = vmatpush1.msra.mxu0 0.0
        %401 = vmatprep.subr.mxu0 0.0
        %402 = vmatpush1.msra.mxu0 0.0
        %403 = vmatprep.subr.mxu0 0.0
        %404 = vmatpush1.msra.mxu0 0.0
        %405 = vmatprep.subr.mxu0 0.0
        %406 = vmatpush1.msra.mxu0 0.0
        %407 = vmatprep.mubr.f32.mxu0 0.0
        %408 = vmatmul.mubr.f32.gmra.mrb[0].mxu0 %v338
        %v409 = vpop.f32.mrb[0].mxu0
        %v410 = vadd.f32 0.0, %v409
        %v411 = vpop.f32.mrb[0].mxu0
        %412 = vmatprep.mubr.f32.mxu0 0.0
        %413 = vmatmul.mubr.f32.gmra.mrb[0].mxu0 %v341
        %v414 = vpop.f32.mrb[0].mxu0
        %v415 = vadd.f32 0.0, %v414
        %v416 = vpop.f32.mrb[0].mxu0
        %417 = vdwg.mxu0
        %v418 = vadd.f32 %v329, %v410
        %v419 = vadd.f32 %v329, %v415
        %v420 = vld [vmem:[#allocation2 + $0x1] sm:$0xff]
        %v421 = vld [vmem:[#allocation2 + $0x9] sm:$0xff]
        %s422 = scalar_lea.vmem [#allocation7], 32
        %v423 = vld [vmem:[%s422] sm:$0xff]
        %v424 = vld [vmem:[%s422 + $0x8] sm:$0xff]
        %v425 = vld [vmem:[%s422 + $0x10] sm:$0xff]
        %v426 = vld [vmem:[%s422 + $0x18] sm:$0xff]
        %v428 = vsel %vm319, %v420, 0
        %v431 = vsel %vm319, %v421, 0
        %433 = vmatprep.subr.mxu0 0.0
        %434 = vmatpush1.msra.mxu0 %v423
        %435 = vmatprep.subr.mxu0 0.0
        %436 = vmatpush1.msra.mxu0 %v424
        %437 = vmatprep.subr.mxu0 0.0
        %438 = vmatpush1.msra.mxu0 %v425
        %439 = vmatprep.subr.mxu0 0.0
        %440 = vmatpush1.msra.mxu0 %v426
        %441 = vmatprep.subr.mxu0 0.0
        %442 = vmatpush1.msra.mxu0 0.0
        %443 = vmatprep.subr.mxu0 0.0
        %444 = vmatpush1.msra.mxu0 0.0
        %445 = vmatprep.subr.mxu0 0.0
        %446 = vmatpush1.msra.mxu0 0.0
        %447 = vmatprep.subr.mxu0 0.0
        %448 = vmatpush1.msra.mxu0 0.0
        %449 = vmatprep.subr.mxu0 0.0
        %450 = vmatpush1.msra.mxu0 0.0
        %451 = vmatprep.subr.mxu0 0.0
        %452 = vmatpush1.msra.mxu0 0.0
        %453 = vmatprep.subr.mxu0 0.0
        %454 = vmatpush1.msra.mxu0 0.0
        %455 = vmatprep.subr.mxu0 0.0
        %456 = vmatpush1.msra.mxu0 0.0
        %457 = vmatprep.subr.mxu0 0.0
        %458 = vmatpush1.msra.mxu0 0.0
        %459 = vmatprep.subr.mxu0 0.0
        %460 = vmatpush1.msra.mxu0 0.0
        %461 = vmatprep.subr.mxu0 0.0
        %462 = vmatpush1.msra.mxu0 0.0
        %463 = vmatprep.subr.mxu0 0.0
        %464 = vmatpush1.msra.mxu0 0.0
        %465 = vmatprep.subr.mxu0 0.0
        %466 = vmatpush1.msra.mxu0 0.0
        %467 = vmatprep.subr.mxu0 0.0
        %468 = vmatpush1.msra.mxu0 0.0
        %469 = vmatprep.subr.mxu0 0.0
        %470 = vmatpush1.msra.mxu0 0.0
        %471 = vmatprep.subr.mxu0 0.0
        %472 = vmatpush1.msra.mxu0 0.0
        %473 = vmatprep.subr.mxu0 0.0
        %474 = vmatpush1.msra.mxu0 0.0
        %475 = vmatprep.subr.mxu0 0.0
        %476 = vmatpush1.msra.mxu0 0.0
        %477 = vmatprep.subr.mxu0 0.0
        %478 = vmatpush1.msra.mxu0 0.0
        %479 = vmatprep.subr.mxu0 0.0
        %480 = vmatpush1.msra.mxu0 0.0
        %481 = vmatprep.subr.mxu0 0.0
        %482 = vmatpush1.msra.mxu0 0.0
        %483 = vmatprep.subr.mxu0 0.0
        %484 = vmatpush1.msra.mxu0 0.0
        %485 = vmatprep.subr.mxu0 0.0
        %486 = vmatpush1.msra.mxu0 0.0
        %487 = vmatprep.subr.mxu0 0.0
        %488 = vmatpush1.msra.mxu0 0.0
        %489 = vmatprep.subr.mxu0 0.0
        %490 = vmatpush1.msra.mxu0 0.0
        %491 = vmatprep.subr.mxu0 0.0
        %492 = vmatpush1.msra.mxu0 0.0
        %493 = vmatprep.subr.mxu0 0.0
        %494 = vmatpush1.msra.mxu0 0.0
        %495 = vmatprep.subr.mxu0 0.0
        %496 = vmatpush1.msra.mxu0 0.0
        %497 = vmatprep.mubr.f32.mxu0 0.0
        %498 = vmatmul.mubr.f32.gmra.mrb[0].mxu0 %v428
        %v499 = vpop.f32.mrb[0].mxu0
        %v500 = vadd.f32 0.0, %v499
        %v501 = vpop.f32.mrb[0].mxu0
        %502 = vmatprep.mubr.f32.mxu0 0.0
        %503 = vmatmul.mubr.f32.gmra.mrb[0].mxu0 %v431
        %v504 = vpop.f32.mrb[0].mxu0
        %v505 = vadd.f32 0.0, %v504
        %v506 = vpop.f32.mrb[0].mxu0
        %507 = vdwg.mxu0
        %v508 = vadd.f32 %v418, %v500
        %v509 = vadd.f32 %v419, %v505
        %v510 = vld [vmem:[#allocation2 + $0x2] sm:$0xff]
        %v511 = vld [vmem:[#allocation2 + $0xa] sm:$0xff]
        %s512 = scalar_lea.vmem [#allocation7], 64
        %v513 = vld [vmem:[%s512] sm:$0xff]
        %v514 = vld [vmem:[%s512 + $0x8] sm:$0xff]
        %v515 = vld [vmem:[%s512 + $0x10] sm:$0xff]
        %v516 = vld [vmem:[%s512 + $0x18] sm:$0xff]
        %v518 = vsel %vm319, %v510, 0
        %v521 = vsel %vm319, %v511, 0
        %523 = vmatprep.subr.mxu0 0.0
        %524 = vmatpush1.msra.mxu0 %v513
        %525 = vmatprep.subr.mxu0 0.0
        %526 = vmatpush1.msra.mxu0 %v514
        %527 = vmatprep.subr.mxu0 0.0
        %528 = vmatpush1.msra.mxu0 %v515
        %529 = vmatprep.subr.mxu0 0.0
        %530 = vmatpush1.msra.mxu0 %v516
        %531 = vmatprep.subr.mxu0 0.0
        %532 = vmatpush1.msra.mxu0 0.0
        %533 = vmatprep.subr.mxu0 0.0
        %534 = vmatpush1.msra.mxu0 0.0
        %535 = vmatprep.subr.mxu0 0.0
        %536 = vmatpush1.msra.mxu0 0.0
        %537 = vmatprep.subr.mxu0 0.0
        %538 = vmatpush1.msra.mxu0 0.0
        %539 = vmatprep.subr.mxu0 0.0
        %540 = vmatpush1.msra.mxu0 0.0
        %541 = vmatprep.subr.mxu0 0.0
        %542 = vmatpush1.msra.mxu0 0.0
        %543 = vmatprep.subr.mxu0 0.0
        %544 = vmatpush1.msra.mxu0 0.0
        %545 = vmatprep.subr.mxu0 0.0
        %546 = vmatpush1.msra.mxu0 0.0
        %547 = vmatprep.subr.mxu0 0.0
        %548 = vmatpush1.msra.mxu0 0.0
        %549 = vmatprep.subr.mxu0 0.0
        %550 = vmatpush1.msra.mxu0 0.0
        %551 = vmatprep.subr.mxu0 0.0
        %552 = vmatpush1.msra.mxu0 0.0
        %553 = vmatprep.subr.mxu0 0.0
        %554 = vmatpush1.msra.mxu0 0.0
        %555 = vmatprep.subr.mxu0 0.0
        %556 = vmatpush1.msra.mxu0 0.0
        %557 = vmatprep.subr.mxu0 0.0
        %558 = vmatpush1.msra.mxu0 0.0
        %559 = vmatprep.subr.mxu0 0.0
        %560 = vmatpush1.msra.mxu0 0.0
        %561 = vmatprep.subr.mxu0 0.0
        %562 = vmatpush1.msra.mxu0 0.0
        %563 = vmatprep.subr.mxu0 0.0
        %564 = vmatpush1.msra.mxu0 0.0
        %565 = vmatprep.subr.mxu0 0.0
        %566 = vmatpush1.msra.mxu0 0.0
        %567 = vmatprep.subr.mxu0 0.0
        %568 = vmatpush1.msra.mxu0 0.0
        %569 = vmatprep.subr.mxu0 0.0
        %570 = vmatpush1.msra.mxu0 0.0
        %571 = vmatprep.subr.mxu0 0.0
        %572 = vmatpush1.msra.mxu0 0.0
        %573 = vmatprep.subr.mxu0 0.0
        %574 = vmatpush1.msra.mxu0 0.0
        %575 = vmatprep.subr.mxu0 0.0
        %576 = vmatpush1.msra.mxu0 0.0
        %577 = vmatprep.subr.mxu0 0.0
        %578 = vmatpush1.msra.mxu0 0.0
        %579 = vmatprep.subr.mxu0 0.0
        %580 = vmatpush1.msra.mxu0 0.0
        %581 = vmatprep.subr.mxu0 0.0
        %582 = vmatpush1.msra.mxu0 0.0
        %583 = vmatprep.subr.mxu0 0.0
        %584 = vmatpush1.msra.mxu0 0.0
        %585 = vmatprep.subr.mxu0 0.0
        %586 = vmatpush1.msra.mxu0 0.0
        %587 = vmatprep.mubr.f32.mxu0 0.0
        %588 = vmatmul.mubr.f32.gmra.mrb[0].mxu0 %v518
        %v589 = vpop.f32.mrb[0].mxu0
        %v590 = vadd.f32 0.0, %v589
        %v591 = vpop.f32.mrb[0].mxu0
        %592 = vmatprep.mubr.f32.mxu0 0.0
        %593 = vmatmul.mubr.f32.gmra.mrb[0].mxu0 %v521
        %v594 = vpop.f32.mrb[0].mxu0
        %v595 = vadd.f32 0.0, %v594
        %v596 = vpop.f32.mrb[0].mxu0
        %597 = vdwg.mxu0
        %v598 = vadd.f32 %v508, %v590
        %v599 = vadd.f32 %v509, %v595
        %v600 = vmax.f32 %v598, 0.0
        %v601 = vmax.f32 %v599, 0.0
        %602 = vst.msk [vmem:[%s315] sm:$0xff] %vm319, %v600
        %603 = vst.msk [vmem:[%s315 + $0x8] sm:$0xff] %vm319, %v601
        %s604 = smul.u32 2, %s26
        %p605 = scmp.lt.s32.totalorder %s25, 1
        %s606 = scalar_select %p605, %s25, 1
        %p607 = scmp.lt.s32.totalorder %s604, 1
        %s608 = scalar_select %p607, %s604, 1
        %s609 = smul.addr %s606, 2
        %s610 = sadd.s32 %s608, %s609
        %s611 = smul.addr %s610, 8
        %s612 = scalar_lea.vmem %s4, %s611
        // Predicated region
        $region49: #{tpu_custom_call.1} parent=35 // pred_check
          %p613 = pneg %p159
        $region50: #{tpu_custom_call.1} parent=35 // pred_check_branch
          %615 = sbr.rel (%p613) target = $region52
        $region51: #{tpu_custom_call.1} parent=35 // pred_region
          %s616 = smul.u32 2, %s26
        $region52: #{tpu_custom_call.1} parent=35 // pred_fallthru
          _
      $region36: #{tpu_custom_call.1} parent=5 // pred_fallthru
        _
      %p617 = scmp.le.s32.totalorder 2, %s16
      // Predicated region
      $region53: #{tpu_custom_call.1} parent=5 // pred_check
        %p618 = pneg %p617
      $region54: #{tpu_custom_call.1} parent=5 // pred_check_branch
        %620 = sbr.rel (%p618) target = $region56
      $region55: #{tpu_custom_call.1} parent=5 // pred_region
        %s621 = ssub.s32 %s16, 2
        // Predicated region
        $region57: #{tpu_custom_call.1} parent=55 // pred_check
          %p622 = pneg %p165
        $region58: #{tpu_custom_call.1} parent=55 // pred_check_branch
          %624 = sbr.rel (%p622) target = $region60
        $region59: #{tpu_custom_call.1} parent=55 // pred_region
          %s625 = smul.u32 2, %s28
          %p626 = scmp.lt.s32.totalorder %s27, 1
          %s627 = scalar_select %p626, %s27, 1
          %p628 = scmp.lt.s32.totalorder %s625, 1
          %s629 = scalar_select %p628, %s625, 1
          %s630 = smul.addr %s627, 2
          %s631 = sadd.s32 %s629, %s630
          %s632 = smul.addr %s631, 8
          %s633 = scalar_lea.vmem %s4, %s632
        $region60: #{tpu_custom_call.1} parent=55 // pred_fallthru
          _
      $region56: #{tpu_custom_call.1} parent=5 // pred_fallthru
        _
    $region6: #{tpu_custom_call.1} parent=1 // loop_footer
      %s20 = sadd.s32 1, %s16
    $region7: #{tpu_custom_call.1} parent=1 // loop_footer_branch
      %15 = sbr.rel target = $region3
    $region8: #{tpu_custom_call.1} parent=1 // loop_exit
      _
    %634 = vsyncpa [#allocation4], 1
    %s635 = scalar_lea.sflag [#allocation4], 1
    %636 = vsyncpa %s635, 1
    %637 = vsyncpa [#allocation6], 1
    %s638 = scalar_lea.sflag [#allocation6], 1
    %639 = vsyncpa %s638, 1

</llo_original>
